<compile_context>
chip_gen: v7x
topology: tpu7x:2x2x1
jax: 0.10.0
libtpu: 0.0.40
codegen_flags: <defaults>
</compile_context>

<pallas_src>
import functools

import jax
import jax.numpy as jnp
from jax.experimental import pallas as pl
from jax.experimental.pallas import tpu as pltpu

STATE_SPACE = 4     # CartPole-v0 observation dim
HIDDEN = 128
LANE = 128          # TPU lane width


def _round_up(x, m):
    return (x + m - 1) // m * m


def critic_kernel(x_ref, w1_ref, b1_ref, w2_ref, b2_ref, o_ref):
    """One batch tile (batch on the lane axis).

      x_ref : (STATE_SPACE, TM)      f32  states, transposed
      w1_ref: (STATE_SPACE, HIDDEN, 1) f32  l1.weight columns (lane-offset-0 slabs)
      b1_ref: (HIDDEN, 1)            f32
      w2_ref: (HIDDEN, 1)            f32  l2.weight as a column
      b2_ref: (1,)                   f32  SMEM scalar
      o_ref : (1, TM)                f32  lane-dense output row
    """
    x = x_ref[...]                                      # (S, TM)

    # ---- Layer 1: K=4 matmul rewritten as 4 VPU FMAs (fully unrolled). ----
    acc = w1_ref[0] * x[0:1, :]                         # (H,1)*(1,TM) -> (H,TM)
    for k in range(1, STATE_SPACE):
        acc = acc + w1_ref[k] * x[k:k + 1, :]
    h = jnp.maximum(acc + b1_ref[...], 0.0)             # bias + ReLU   (H, TM)

    # ---- Layer 2: N=1 matmul rewritten as VPU mul + sublane reduction. ----
    v = jnp.sum(h * w2_ref[...], axis=0, keepdims=True)  # (1, TM)
    o_ref[...] = v + b2_ref[0]                           # scalar bias from SMEM


@functools.partial(jax.jit, static_argnames=("tm",))
def critic_forward(state, w1, b1, w2, b2, *, tm=512):
    """Critic forward pass.

    state: (B, STATE_SPACE) f32
    Params in PyTorch layouts: w1 (HIDDEN, STATE_SPACE), b1 (HIDDEN,),
                               w2 (1, HIDDEN), b2 (1,)
    Returns: (B, 1) f32
    """
    B = state.shape[0]
    # Don't over-pad tiny batches; keep the tile a lane multiple.
    tm = min(tm, max(LANE, _round_up(B, LANE)))
    bp = _round_up(B, tm)

    # Batch on the lane axis: transpose and zero-pad to a full tile multiple.
    x_t = jnp.zeros((STATE_SPACE, bp), jnp.float32).at[:, :B].set(
        state.T.astype(jnp.float32))

    # Per-input-feature weight columns as (S, H, 1) slabs -> ref[k] is (H, 1).
    w1_cols = w1.astype(jnp.float32).T.reshape(STATE_SPACE, HIDDEN, 1)
    b1_col = b1.astype(jnp.float32).reshape(HIDDEN, 1)
    w2_col = w2.astype(jnp.float32).reshape(HIDDEN, 1)
    b2_s = b2.astype(jnp.float32).reshape(1)

    grid = (bp // tm,)
    out_row = pl.pallas_call(
        critic_kernel,
        out_shape=jax.ShapeDtypeStruct((1, bp), jnp.float32),
        grid_spec=pltpu.PrefetchScalarGridSpec(
            num_scalar_prefetch=0,
            grid=grid,
            in_specs=[
                pl.BlockSpec((STATE_SPACE, tm), lambda i: (0, i)),
                pl.BlockSpec((STATE_SPACE, HIDDEN, 1), lambda i: (0, 0, 0)),
                pl.BlockSpec((HIDDEN, 1), lambda i: (0, 0)),
                pl.BlockSpec((HIDDEN, 1), lambda i: (0, 0)),
                pl.BlockSpec(memory_space=pltpu.MemorySpace.SMEM),
            ],
            out_specs=pl.BlockSpec((1, tm), lambda i: (0, i)),
        ),
        compiler_params=pltpu.CompilerParams(
            dimension_semantics=("parallel",)),
    )(x_t, w1_cols, b1_col, w2_col, b2_s)

    return out_row[0, :B].reshape(B, 1)


def init_params(key):
    """Mimic PyTorch nn.Linear default init (uniform +/- 1/sqrt(fan_in)),
    stored in PyTorch layouts: weight (out, in), bias (out,)."""
    k1, k2, k3, k4 = jax.random.split(key, 4)
    bound1 = 1.0 / jnp.sqrt(jnp.float32(STATE_SPACE))
    bound2 = 1.0 / jnp.sqrt(jnp.float32(HIDDEN))
    w1 = jax.random.uniform(k1, (HIDDEN, STATE_SPACE), jnp.float32, -bound1, bound1)
    b1 = jax.random.uniform(k2, (HIDDEN,), jnp.float32, -bound1, bound1)
    w2 = jax.random.uniform(k3, (1, HIDDEN), jnp.float32, -bound2, bound2)
    b2 = jax.random.uniform(k4, (1,), jnp.float32, -bound2, bound2)
    return w1, b1, w2, b2


def _reference(state, w1, b1, w2, b2):
    return jnp.maximum(state @ w1.T + b1, 0.0) @ w2.T + b2


if __name__ == "__main__":
    key = jax.random.PRNGKey(0)
    pkey, xkey = jax.random.split(key)
    w1, b1, w2, b2 = init_params(pkey)

    # Small batch of CartPole states (single-tile path).
    B = 8
    state = jax.random.normal(xkey, (B, STATE_SPACE), jnp.float32)
    out = jax.block_until_ready(critic_forward(state, w1, b1, w2, b2))
    ref = _reference(state, w1, b1, w2, b2)
    assert out.shape == (B, 1)
    assert jnp.allclose(out, ref, atol=1e-4, rtol=1e-4)

    # Larger, non-multiple batch to exercise the tiled/parallel grid path.
    B2 = 1000
    state2 = jax.random.normal(jax.random.PRNGKey(1), (B2, STATE_SPACE), jnp.float32)
    out2 = jax.block_until_ready(critic_forward(state2, w1, b1, w2, b2))
    ref2 = _reference(state2, w1, b1, w2, b2)
    assert out2.shape == (B2, 1)
    assert jnp.allclose(out2, ref2, atol=1e-4, rtol=1e-4)

    print("KERNEL_OK")
</pallas_src>

<mosaic_0001>
module attributes {stable_mosaic.version = 11 : i64} {
  func.func @critic_kernel(%arg0: i32, %arg1: memref<4x128xf32, #tpu.memory_space<vmem>>, %arg2: memref<4x128x1xf32, #tpu.memory_space<vmem>>, %arg3: memref<128x1xf32, #tpu.memory_space<vmem>>, %arg4: memref<128x1xf32, #tpu.memory_space<vmem>>, %arg5: memref<1xf32, #tpu.memory_space<smem>>, %arg6: memref<1x128xf32, #tpu.memory_space<vmem>>) attributes {dimension_semantics = [#tpu.dimension_semantics<parallel>], iteration_bounds = array<i64: 1>, scalar_prefetch = 0 : i64, scratch_operands = 0 : i64, tpu.core_type = #tpu.core_type<tc>, window_params = [{transform_indices = @transform_0, window_bounds = array<i64: 4, 128>}, {pipeline_mode = #tpu.pipeline_mode<synchronous>, transform_indices = @transform_1, window_bounds = array<i64: 4, 128, 1>}, {pipeline_mode = #tpu.pipeline_mode<synchronous>, transform_indices = @transform_2, window_bounds = array<i64: 128, 1>}, {pipeline_mode = #tpu.pipeline_mode<synchronous>, transform_indices = @transform_3, window_bounds = array<i64: 128, 1>}, {transform_indices = @transform_4, window_bounds = array<i64: 1>}, {transform_indices = @transform_5, window_bounds = array<i64: 1, 128>}]} {
    %c0 = arith.constant 0 : index
    %c0_0 = arith.constant 0 : index
    %0 = vector.load %arg1[%c0, %c0_0] : memref<4x128xf32, #tpu.memory_space<vmem>>, vector<4x128xf32>
    %c0_1 = arith.constant 0 : index
    %c0_2 = arith.constant 0 : index
    %c0_3 = arith.constant 0 : index
    %1 = vector.load %arg2[%c0_1, %c0_2, %c0_3] : memref<4x128x1xf32, #tpu.memory_space<vmem>>, vector<1x128x1xf32>
    %2 = vector.shape_cast %1 : vector<1x128x1xf32> to vector<128x1xf32>
    %3 = vector.extract_strided_slice %0 {offsets = [0, 0], sizes = [1, 128], strides = [1, 1]} : vector<4x128xf32> to vector<1x128xf32>
    %4 = vector.broadcast %2 : vector<128x1xf32> to vector<128x128xf32>
    %5 = vector.broadcast %3 : vector<1x128xf32> to vector<128x128xf32>
    %6 = arith.mulf %4, %5 : vector<128x128xf32>
    %c1 = arith.constant 1 : index
    %c0_4 = arith.constant 0 : index
    %c0_5 = arith.constant 0 : index
    %7 = vector.load %arg2[%c1, %c0_4, %c0_5] : memref<4x128x1xf32, #tpu.memory_space<vmem>>, vector<1x128x1xf32>
    %8 = vector.shape_cast %7 : vector<1x128x1xf32> to vector<128x1xf32>
    %9 = vector.extract_strided_slice %0 {offsets = [1, 0], sizes = [1, 128], strides = [1, 1]} : vector<4x128xf32> to vector<1x128xf32>
    %10 = vector.broadcast %8 : vector<128x1xf32> to vector<128x128xf32>
    %11 = vector.broadcast %9 : vector<1x128xf32> to vector<128x128xf32>
    %12 = arith.mulf %10, %11 : vector<128x128xf32>
    %13 = arith.addf %6, %12 : vector<128x128xf32>
    %c2 = arith.constant 2 : index
    %c0_6 = arith.constant 0 : index
    %c0_7 = arith.constant 0 : index
    %14 = vector.load %arg2[%c2, %c0_6, %c0_7] : memref<4x128x1xf32, #tpu.memory_space<vmem>>, vector<1x128x1xf32>
    %15 = vector.shape_cast %14 : vector<1x128x1xf32> to vector<128x1xf32>
    %16 = vector.extract_strided_slice %0 {offsets = [2, 0], sizes = [1, 128], strides = [1, 1]} : vector<4x128xf32> to vector<1x128xf32>
    %17 = vector.broadcast %15 : vector<128x1xf32> to vector<128x128xf32>
    %18 = vector.broadcast %16 : vector<1x128xf32> to vector<128x128xf32>
    %19 = arith.mulf %17, %18 : vector<128x128xf32>
    %20 = arith.addf %13, %19 : vector<128x128xf32>
    %c3 = arith.constant 3 : index
    %c0_8 = arith.constant 0 : index
    %c0_9 = arith.constant 0 : index
    %21 = vector.load %arg2[%c3, %c0_8, %c0_9] : memref<4x128x1xf32, #tpu.memory_space<vmem>>, vector<1x128x1xf32>
    %22 = vector.shape_cast %21 : vector<1x128x1xf32> to vector<128x1xf32>
    %23 = vector.extract_strided_slice %0 {offsets = [3, 0], sizes = [1, 128], strides = [1, 1]} : vector<4x128xf32> to vector<1x128xf32>
    %24 = vector.broadcast %22 : vector<128x1xf32> to vector<128x128xf32>
    %25 = vector.broadcast %23 : vector<1x128xf32> to vector<128x128xf32>
    %26 = arith.mulf %24, %25 : vector<128x128xf32>
    %27 = arith.addf %20, %26 : vector<128x128xf32>
    %c0_10 = arith.constant 0 : index
    %c0_11 = arith.constant 0 : index
    %28 = vector.load %arg3[%c0_10, %c0_11] : memref<128x1xf32, #tpu.memory_space<vmem>>, vector<128x1xf32>
    %29 = vector.broadcast %28 : vector<128x1xf32> to vector<128x128xf32>
    %30 = arith.addf %27, %29 : vector<128x128xf32>
    %cst = arith.constant 0.000000e+00 : f32
    %31 = vector.broadcast %cst : f32 to vector<128x128xf32>
    %32 = arith.maximumf %30, %31 : vector<128x128xf32>
    %c0_12 = arith.constant 0 : index
    %c0_13 = arith.constant 0 : index
    %33 = vector.load %arg4[%c0_12, %c0_13] : memref<128x1xf32, #tpu.memory_space<vmem>>, vector<128x1xf32>
    %34 = vector.broadcast %33 : vector<128x1xf32> to vector<128x128xf32>
    %35 = arith.mulf %32, %34 : vector<128x128xf32>
    %cst_14 = arith.constant dense<0.000000e+00> : vector<128xf32>
    %36 = vector.multi_reduction <add>, %35, %cst_14 [0] : vector<128x128xf32> to vector<128xf32>
    %37 = vector.shape_cast %36 : vector<128xf32> to vector<1x128xf32>
    %c0_15 = arith.constant 0 : index
    %38 = memref.load %arg5[%c0_15] : memref<1xf32, #tpu.memory_space<smem>>
    %39 = vector.broadcast %38 : f32 to vector<1x128xf32>
    %40 = arith.addf %37, %39 : vector<1x128xf32>
    %c0_16 = arith.constant 0 : index
    %c0_17 = arith.constant 0 : index
    %41 = vector.load %arg6[%c0_16, %c0_17] : memref<1x128xf32, #tpu.memory_space<vmem>>, vector<1x128xf32>
    tpu.vector_store %arg6[%c0_16, %c0_17], %40 {strides = array<i32>} : memref<1x128xf32, #tpu.memory_space<vmem>>, vector<1x128xf32>,
    return
  }
  func.func @transform_0(%arg0: i32) -> (i32, i32) {
    %c0_i32 = arith.constant 0 : i32
    %c0_i32_0 = arith.constant 0 : i32
    return %c0_i32, %arg0 : i32, i32
  }
  func.func @transform_1(%arg0: i32) -> (i32, i32, i32) {
    %c0_i32 = arith.constant 0 : i32
    %c0_i32_0 = arith.constant 0 : i32
    %c0_i32_1 = arith.constant 0 : i32
    %c0_i32_2 = arith.constant 0 : i32
    return %c0_i32, %c0_i32_0, %c0_i32_1 : i32, i32, i32
  }
  func.func @transform_2(%arg0: i32) -> (i32, i32) {
    %c0_i32 = arith.constant 0 : i32
    %c0_i32_0 = arith.constant 0 : i32
    %c0_i32_1 = arith.constant 0 : i32
    return %c0_i32, %c0_i32_0 : i32, i32
  }
  func.func @transform_3(%arg0: i32) -> (i32, i32) {
    %c0_i32 = arith.constant 0 : i32
    %c0_i32_0 = arith.constant 0 : i32
    %c0_i32_1 = arith.constant 0 : i32
    return %c0_i32, %c0_i32_0 : i32, i32
  }
  func.func @transform_4(%arg0: i32) -> i32 {
    %c0_i32 = arith.constant 0 : i32
    %c0_i32_0 = arith.constant 0 : i32
    return %c0_i32 : i32
  }
  func.func @transform_5(%arg0: i32) -> (i32, i32) {
    %c0_i32 = arith.constant 0 : i32
    %c0_i32_0 = arith.constant 0 : i32
    return %c0_i32, %arg0 : i32, i32
  }
}

</mosaic_0001>

<llo_original>
// kernel: critic_forward.1
$region0: #{critic_forward.1}
  #allocation0 [shape = 'u32[]', space=smem, size = 0x4, offset = 0x4, fixed_abs, tag = 'smem constant byte address 0x4 - core index']
  #allocation1 [shape = 'u32[144,128]{1,0:T(1,128)}', space=vmem, size = 0x12000, scoped, tag = 'internal scratch']
  #allocation2 [shape = 'f32[1]{0:T(128)S(6)}', space=smem, size = 0x200, scoped, tag = 'scoped memory for critic_forward.1']
  %s0 = inlined_call_operand.vmem [shape: f32[4,128], index: 0, kind: input, shape index: {}]
  %s1 = inlined_call_operand.vmem [shape: f32[4,128,1], index: 1, kind: input, shape index: {}]
  %s2 = inlined_call_operand.vmem [shape: f32[128,1], index: 2, kind: input, shape index: {}]
  %s3 = inlined_call_operand.vmem [shape: f32[128,1], index: 3, kind: input, shape index: {}]
  %s4 = inlined_call_operand.<no memory space> [shape: f32[1], index: 4, kind: input, shape index: {}]
  %s5 = inlined_call_operand.vmem [shape: f32[1,128], index: 5, kind: output, shape index: {}]
  %s6 = sld [smem:[#allocation0]]
  $region30: #{critic_forward.1} parent=0
    _
  %s8 = ssub.s32 1, %s6
  %s9 = scalar_select 0, %s8, %s6
  %10 = sst [smem:[#allocation2]] %s4
  // Predicated region
  $region2: #{critic_forward.1} parent=0 // pred_check
    _
  $region3: #{critic_forward.1} parent=0 // pred_check_branch
    %12 = sbr.rel (0) target = $region5
  $region4: #{critic_forward.1} parent=0 // pred_region
    _
  $region5: #{critic_forward.1} parent=0 // pred_fallthru
    _
  // Predicated region
  $region6: #{critic_forward.1} parent=0 // pred_check
    _
  $region7: #{critic_forward.1} parent=0 // pred_check_branch
    %14 = sbr.rel (0) target = $region9
  $region8: #{critic_forward.1} parent=0 // pred_region
    _
  $region9: #{critic_forward.1} parent=0 // pred_fallthru
    _
  // Predicated region
  $region10: #{critic_forward.1} parent=0 // pred_check
    _
  $region11: #{critic_forward.1} parent=0 // pred_check_branch
    %16 = sbr.rel (0) target = $region13
  $region12: #{critic_forward.1} parent=0 // pred_region
    _
  $region13: #{critic_forward.1} parent=0 // pred_fallthru
    _
  // Predicated region
  $region14: #{critic_forward.1} parent=0 // pred_check
    _
  $region15: #{critic_forward.1} parent=0 // pred_check_branch
    %18 = sbr.rel (0) target = $region17
  $region16: #{critic_forward.1} parent=0 // pred_region
    _
  $region17: #{critic_forward.1} parent=0 // pred_fallthru
    _
  // Predicated region
  $region18: #{critic_forward.1} parent=0 // pred_check
    _
  $region19: #{critic_forward.1} parent=0 // pred_check_branch
    %20 = sbr.rel (0) target = $region21
  $region20: #{critic_forward.1} parent=0 // pred_region
    _
  $region21: #{critic_forward.1} parent=0 // pred_fallthru
    _
  %v21 = vld [vmem:[%s0] sm:$0xf]
  %v22 = vld [vmem:[%s1] sm:$0xff]
  %v23 = vld [vmem:[%s1 + $0x8] sm:$0xff]
  %v24 = vld [vmem:[%s1 + $0x10] sm:$0xff]
  %v25 = vld [vmem:[%s1 + $0x18] sm:$0xff]
  %v26 = vld [vmem:[%s1 + $0x20] sm:$0xff]
  %v27 = vld [vmem:[%s1 + $0x28] sm:$0xff]
  %v28 = vld [vmem:[%s1 + $0x30] sm:$0xff]
  %v29 = vld [vmem:[%s1 + $0x38] sm:$0xff]
  %v30 = vld [vmem:[%s1 + $0x40] sm:$0xff]
  %v31 = vld [vmem:[%s1 + $0x48] sm:$0xff]
  %v32 = vld [vmem:[%s1 + $0x50] sm:$0xff]
  %v33 = vld [vmem:[%s1 + $0x58] sm:$0xff]
  %v34 = vld [vmem:[%s1 + $0x60] sm:$0xff]
  %v35 = vld [vmem:[%s1 + $0x68] sm:$0xff]
  %v36 = vld [vmem:[%s1 + $0x70] sm:$0xff]
  %v37 = vld [vmem:[%s1 + $0x78] sm:$0xff]
  %39 = vset.pattern.permute.xlu0 0
  %40 = vperm.xlu0 %39, %v22
  %v41 = vpop.permute.xlu0 %40
  %44 = vset.pattern.permute.xlu0 0
  %45 = vperm.xlu0 %44, %v23
  %v46 = vpop.permute.xlu0 %45
  %49 = vset.pattern.permute.xlu0 0
  %50 = vperm.xlu0 %49, %v24
  %v51 = vpop.permute.xlu0 %50
  %54 = vset.pattern.permute.xlu0 0
  %55 = vperm.xlu0 %54, %v25
  %v56 = vpop.permute.xlu0 %55
  %59 = vset.pattern.permute.xlu0 0
  %60 = vperm.xlu0 %59, %v26
  %v61 = vpop.permute.xlu0 %60
  %64 = vset.pattern.permute.xlu0 0
  %65 = vperm.xlu0 %64, %v27
  %v66 = vpop.permute.xlu0 %65
  %69 = vset.pattern.permute.xlu0 0
  %70 = vperm.xlu0 %69, %v28
  %v71 = vpop.permute.xlu0 %70
  %74 = vset.pattern.permute.xlu0 0
  %75 = vperm.xlu0 %74, %v29
  %v76 = vpop.permute.xlu0 %75
  %79 = vset.pattern.permute.xlu0 0
  %80 = vperm.xlu0 %79, %v30
  %v81 = vpop.permute.xlu0 %80
  %84 = vset.pattern.permute.xlu0 0
  %85 = vperm.xlu0 %84, %v31
  %v86 = vpop.permute.xlu0 %85
  %89 = vset.pattern.permute.xlu0 0
  %90 = vperm.xlu0 %89, %v32
  %v91 = vpop.permute.xlu0 %90
  %94 = vset.pattern.permute.xlu0 0
  %95 = vperm.xlu0 %94, %v33
  %v96 = vpop.permute.xlu0 %95
  %99 = vset.pattern.permute.xlu0 0
  %100 = vperm.xlu0 %99, %v34
  %v101 = vpop.permute.xlu0 %100
  %104 = vset.pattern.permute.xlu0 0
  %105 = vperm.xlu0 %104, %v35
  %v106 = vpop.permute.xlu0 %105
  %109 = vset.pattern.permute.xlu0 0
  %110 = vperm.xlu0 %109, %v36
  %v111 = vpop.permute.xlu0 %110
  %114 = vset.pattern.permute.xlu0 0
  %115 = vperm.xlu0 %114, %v37
  %v116 = vpop.permute.xlu0 %115
  %v118 = vlaneseq
  %v119 = vshrl.u32 %v118, 7
  %v120 = vsub.s32 0, %v119
  %v121 = vrot.slane %v21, %v120
  %v122 = vmul.f32 %v41, %v121
  %v123 = vmul.f32 %v46, %v121
  %v124 = vmul.f32 %v51, %v121
  %v125 = vmul.f32 %v56, %v121
  %v126 = vmul.f32 %v61, %v121
  %v127 = vmul.f32 %v66, %v121
  %v128 = vmul.f32 %v71, %v121
  %v129 = vmul.f32 %v76, %v121
  %v130 = vmul.f32 %v81, %v121
  %v131 = vmul.f32 %v86, %v121
  %v132 = vmul.f32 %v91, %v121
  %v133 = vmul.f32 %v96, %v121
  %v134 = vmul.f32 %v101, %v121
  %v135 = vmul.f32 %v106, %v121
  %v136 = vmul.f32 %v111, %v121
  %v137 = vmul.f32 %v116, %v121
  %s138 = scalar_lea.vmem %s1, 128
  %v139 = vld [vmem:[%s138] sm:$0xff]
  %v140 = vld [vmem:[%s138 + $0x8] sm:$0xff]
  %v141 = vld [vmem:[%s138 + $0x10] sm:$0xff]
  %v142 = vld [vmem:[%s138 + $0x18] sm:$0xff]
  %v143 = vld [vmem:[%s138 + $0x20] sm:$0xff]
  %v144 = vld [vmem:[%s138 + $0x28] sm:$0xff]
  %v145 = vld [vmem:[%s138 + $0x30] sm:$0xff]
  %v146 = vld [vmem:[%s138 + $0x38] sm:$0xff]
  %v147 = vld [vmem:[%s138 + $0x40] sm:$0xff]
  %v148 = vld [vmem:[%s138 + $0x48] sm:$0xff]
  %v149 = vld [vmem:[%s138 + $0x50] sm:$0xff]
  %v150 = vld [vmem:[%s138 + $0x58] sm:$0xff]
  %v151 = vld [vmem:[%s138 + $0x60] sm:$0xff]
  %v152 = vld [vmem:[%s138 + $0x68] sm:$0xff]
  %v153 = vld [vmem:[%s138 + $0x70] sm:$0xff]
  %v154 = vld [vmem:[%s138 + $0x78] sm:$0xff]
  %156 = vset.pattern.permute.xlu0 0
  %157 = vperm.xlu0 %156, %v139
  %v158 = vpop.permute.xlu0 %157
  %161 = vset.pattern.permute.xlu0 0
  %162 = vperm.xlu0 %161, %v140
  %v163 = vpop.permute.xlu0 %162
  %166 = vset.pattern.permute.xlu0 0
  %167 = vperm.xlu0 %166, %v141
  %v168 = vpop.permute.xlu0 %167
  %171 = vset.pattern.permute.xlu0 0
  %172 = vperm.xlu0 %171, %v142
  %v173 = vpop.permute.xlu0 %172
  %176 = vset.pattern.permute.xlu0 0
  %177 = vperm.xlu0 %176, %v143
  %v178 = vpop.permute.xlu0 %177
  %181 = vset.pattern.permute.xlu0 0
  %182 = vperm.xlu0 %181, %v144
  %v183 = vpop.permute.xlu0 %182
  %186 = vset.pattern.permute.xlu0 0
  %187 = vperm.xlu0 %186, %v145
  %v188 = vpop.permute.xlu0 %187
  %191 = vset.pattern.permute.xlu0 0
  %192 = vperm.xlu0 %191, %v146
  %v193 = vpop.permute.xlu0 %192
  %196 = vset.pattern.permute.xlu0 0
  %197 = vperm.xlu0 %196, %v147
  %v198 = vpop.permute.xlu0 %197
  %201 = vset.pattern.permute.xlu0 0
  %202 = vperm.xlu0 %201, %v148
  %v203 = vpop.permute.xlu0 %202
  %206 = vset.pattern.permute.xlu0 0
  %207 = vperm.xlu0 %206, %v149
  %v208 = vpop.permute.xlu0 %207
  %211 = vset.pattern.permute.xlu0 0
  %212 = vperm.xlu0 %211, %v150
  %v213 = vpop.permute.xlu0 %212
  %216 = vset.pattern.permute.xlu0 0
  %217 = vperm.xlu0 %216, %v151
  %v218 = vpop.permute.xlu0 %217
  %221 = vset.pattern.permute.xlu0 0
  %222 = vperm.xlu0 %221, %v152
  %v223 = vpop.permute.xlu0 %222
  %226 = vset.pattern.permute.xlu0 0
  %227 = vperm.xlu0 %226, %v153
  %v228 = vpop.permute.xlu0 %227
  %231 = vset.pattern.permute.xlu0 0
  %232 = vperm.xlu0 %231, %v154
  %v233 = vpop.permute.xlu0 %232
  %v235 = vlaneseq
  %v236 = vshrl.u32 %v235, 7
  %v237 = vsub.s32 1, %v236
  %v238 = vrot.slane %v21, %v237
  %v239 = vmul.f32 %v158, %v238
  %v240 = vmul.f32 %v163, %v238
  %v241 = vmul.f32 %v168, %v238
  %v242 = vmul.f32 %v173, %v238
  %v243 = vmul.f32 %v178, %v238
  %v244 = vmul.f32 %v183, %v238
  %v245 = vmul.f32 %v188, %v238
  %v246 = vmul.f32 %v193, %v238
  %v247 = vmul.f32 %v198, %v238
  %v248 = vmul.f32 %v203, %v238
  %v249 = vmul.f32 %v208, %v238
  %v250 = vmul.f32 %v213, %v238
  %v251 = vmul.f32 %v218, %v238
  %v252 = vmul.f32 %v223, %v238
  %v253 = vmul.f32 %v228, %v238
  %v254 = vmul.f32 %v233, %v238
  %v255 = vadd.f32 %v122, %v239
  %v256 = vadd.f32 %v123, %v240
  %v257 = vadd.f32 %v124, %v241
  %v258 = vadd.f32 %v125, %v242
  %v259 = vadd.f32 %v126, %v243
  %v260 = vadd.f32 %v127, %v244
  %v261 = vadd.f32 %v128, %v245
  %v262 = vadd.f32 %v129, %v246
  %v263 = vadd.f32 %v130, %v247
  %v264 = vadd.f32 %v131, %v248
  %v265 = vadd.f32 %v132, %v249
  %v266 = vadd.f32 %v133, %v250
  %v267 = vadd.f32 %v134, %v251
  %v268 = vadd.f32 %v135, %v252
  %v269 = vadd.f32 %v136, %v253
  %v270 = vadd.f32 %v137, %v254
  %s271 = scalar_lea.vmem %s1, 256
  %v272 = vld [vmem:[%s271] sm:$0xff]
  %v273 = vld [vmem:[%s271 + $0x8] sm:$0xff]
  %v274 = vld [vmem:[%s271 + $0x10] sm:$0xff]
  %v275 = vld [vmem:[%s271 + $0x18] sm:$0xff]
  %v276 = vld [vmem:[%s271 + $0x20] sm:$0xff]
  %v277 = vld [vmem:[%s271 + $0x28] sm:$0xff]
  %v278 = vld [vmem:[%s271 + $0x30] sm:$0xff]
  %v279 = vld [vmem:[%s271 + $0x38] sm:$0xff]
  %v280 = vld [vmem:[%s271 + $0x40] sm:$0xff]
  %v281 = vld [vmem:[%s271 + $0x48] sm:$0xff]
  %v282 = vld [vmem:[%s271 + $0x50] sm:$0xff]
  %v283 = vld [vmem:[%s271 + $0x58] sm:$0xff]
  %v284 = vld [vmem:[%s271 + $0x60] sm:$0xff]
  %v285 = vld [vmem:[%s271 + $0x68] sm:$0xff]
  %v286 = vld [vmem:[%s271 + $0x70] sm:$0xff]
  %v287 = vld [vmem:[%s271 + $0x78] sm:$0xff]
  %289 = vset.pattern.permute.xlu0 0
  %290 = vperm.xlu0 %289, %v272
  %v291 = vpop.permute.xlu0 %290
  %294 = vset.pattern.permute.xlu0 0
  %295 = vperm.xlu0 %294, %v273
  %v296 = vpop.permute.xlu0 %295
  %299 = vset.pattern.permute.xlu0 0
  %300 = vperm.xlu0 %299, %v274
  %v301 = vpop.permute.xlu0 %300
  %304 = vset.pattern.permute.xlu0 0
  %305 = vperm.xlu0 %304, %v275
  %v306 = vpop.permute.xlu0 %305
  %309 = vset.pattern.permute.xlu0 0
  %310 = vperm.xlu0 %309, %v276
  %v311 = vpop.permute.xlu0 %310
  %314 = vset.pattern.permute.xlu0 0
  %315 = vperm.xlu0 %314, %v277
  %v316 = vpop.permute.xlu0 %315
  %319 = vset.pattern.permute.xlu0 0
  %320 = vperm.xlu0 %319, %v278
  %v321 = vpop.permute.xlu0 %320
  %324 = vset.pattern.permute.xlu0 0
  %325 = vperm.xlu0 %324, %v279
  %v326 = vpop.permute.xlu0 %325
  %329 = vset.pattern.permute.xlu0 0
  %330 = vperm.xlu0 %329, %v280
  %v331 = vpop.permute.xlu0 %330
  %334 = vset.pattern.permute.xlu0 0
  %335 = vperm.xlu0 %334, %v281
  %v336 = vpop.permute.xlu0 %335
  %339 = vset.pattern.permute.xlu0 0
  %340 = vperm.xlu0 %339, %v282
  %v341 = vpop.permute.xlu0 %340
  %344 = vset.pattern.permute.xlu0 0
  %345 = vperm.xlu0 %344, %v283
  %v346 = vpop.permute.xlu0 %345
  %349 = vset.pattern.permute.xlu0 0
  %350 = vperm.xlu0 %349, %v284
  %v351 = vpop.permute.xlu0 %350
  %354 = vset.pattern.permute.xlu0 0
  %355 = vperm.xlu0 %354, %v285
  %v356 = vpop.permute.xlu0 %355
  %359 = vset.pattern.permute.xlu0 0
  %360 = vperm.xlu0 %359, %v286
  %v361 = vpop.permute.xlu0 %360
  %364 = vset.pattern.permute.xlu0 0
  %365 = vperm.xlu0 %364, %v287
  %v366 = vpop.permute.xlu0 %365
  %v368 = vlaneseq
  %v369 = vshrl.u32 %v368, 7
  %v370 = vsub.s32 2, %v369
  %v371 = vrot.slane %v21, %v370
  %v372 = vmul.f32 %v291, %v371
  %v373 = vmul.f32 %v296, %v371
  %v374 = vmul.f32 %v301, %v371
  %v375 = vmul.f32 %v306, %v371
  %v376 = vmul.f32 %v311, %v371
  %v377 = vmul.f32 %v316, %v371
  %v378 = vmul.f32 %v321, %v371
  %v379 = vmul.f32 %v326, %v371
  %v380 = vmul.f32 %v331, %v371
  %v381 = vmul.f32 %v336, %v371
  %v382 = vmul.f32 %v341, %v371
  %v383 = vmul.f32 %v346, %v371
  %v384 = vmul.f32 %v351, %v371
  %v385 = vmul.f32 %v356, %v371
  %v386 = vmul.f32 %v361, %v371
  %v387 = vmul.f32 %v366, %v371
  %v388 = vadd.f32 %v255, %v372
  %v389 = vadd.f32 %v256, %v373
  %v390 = vadd.f32 %v257, %v374
  %v391 = vadd.f32 %v258, %v375
  %v392 = vadd.f32 %v259, %v376
  %v393 = vadd.f32 %v260, %v377
  %v394 = vadd.f32 %v261, %v378
  %v395 = vadd.f32 %v262, %v379
  %v396 = vadd.f32 %v263, %v380
  %v397 = vadd.f32 %v264, %v381
  %v398 = vadd.f32 %v265, %v382
  %v399 = vadd.f32 %v266, %v383
  %v400 = vadd.f32 %v267, %v384
  %v401 = vadd.f32 %v268, %v385
  %v402 = vadd.f32 %v269, %v386
  %v403 = vadd.f32 %v270, %v387
  %s404 = scalar_lea.vmem %s1, 384
  %v405 = vld [vmem:[%s404] sm:$0xff]
  %v406 = vld [vmem:[%s404 + $0x8] sm:$0xff]
  %v407 = vld [vmem:[%s404 + $0x10] sm:$0xff]
  %v408 = vld [vmem:[%s404 + $0x18] sm:$0xff]
  %v409 = vld [vmem:[%s404 + $0x20] sm:$0xff]
  %v410 = vld [vmem:[%s404 + $0x28] sm:$0xff]
  %v411 = vld [vmem:[%s404 + $0x30] sm:$0xff]
  %v412 = vld [vmem:[%s404 + $0x38] sm:$0xff]
  %v413 = vld [vmem:[%s404 + $0x40] sm:$0xff]
  %v414 = vld [vmem:[%s404 + $0x48] sm:$0xff]
  %v415 = vld [vmem:[%s404 + $0x50] sm:$0xff]
  %v416 = vld [vmem:[%s404 + $0x58] sm:$0xff]
  %v417 = vld [vmem:[%s404 + $0x60] sm:$0xff]
  %v418 = vld [vmem:[%s404 + $0x68] sm:$0xff]
  %v419 = vld [vmem:[%s404 + $0x70] sm:$0xff]
  %v420 = vld [vmem:[%s404 + $0x78] sm:$0xff]
  %422 = vset.pattern.permute.xlu0 0
  %423 = vperm.xlu0 %422, %v405
  %v424 = vpop.permute.xlu0 %423
  %427 = vset.pattern.permute.xlu0 0
  %428 = vperm.xlu0 %427, %v406
  %v429 = vpop.permute.xlu0 %428
  %432 = vset.pattern.permute.xlu0 0
  %433 = vperm.xlu0 %432, %v407
  %v434 = vpop.permute.xlu0 %433
  %437 = vset.pattern.permute.xlu0 0
  %438 = vperm.xlu0 %437, %v408
  %v439 = vpop.permute.xlu0 %438
  %442 = vset.pattern.permute.xlu0 0
  %443 = vperm.xlu0 %442, %v409
  %v444 = vpop.permute.xlu0 %443
  %447 = vset.pattern.permute.xlu0 0
  %448 = vperm.xlu0 %447, %v410
  %v449 = vpop.permute.xlu0 %448
  %452 = vset.pattern.permute.xlu0 0
  %453 = vperm.xlu0 %452, %v411
  %v454 = vpop.permute.xlu0 %453
  %457 = vset.pattern.permute.xlu0 0
  %458 = vperm.xlu0 %457, %v412
  %v459 = vpop.permute.xlu0 %458
  %462 = vset.pattern.permute.xlu0 0
  %463 = vperm.xlu0 %462, %v413
  %v464 = vpop.permute.xlu0 %463
  %467 = vset.pattern.permute.xlu0 0
  %468 = vperm.xlu0 %467, %v414
  %v469 = vpop.permute.xlu0 %468
  %472 = vset.pattern.permute.xlu0 0
  %473 = vperm.xlu0 %472, %v415
  %v474 = vpop.permute.xlu0 %473
  %477 = vset.pattern.permute.xlu0 0
  %478 = vperm.xlu0 %477, %v416
  %v479 = vpop.permute.xlu0 %478
  %482 = vset.pattern.permute.xlu0 0
  %483 = vperm.xlu0 %482, %v417
  %v484 = vpop.permute.xlu0 %483
  %487 = vset.pattern.permute.xlu0 0
  %488 = vperm.xlu0 %487, %v418
  %v489 = vpop.permute.xlu0 %488
  %492 = vset.pattern.permute.xlu0 0
  %493 = vperm.xlu0 %492, %v419
  %v494 = vpop.permute.xlu0 %493
  %497 = vset.pattern.permute.xlu0 0
  %498 = vperm.xlu0 %497, %v420
  %v499 = vpop.permute.xlu0 %498
  %v501 = vlaneseq
  %v502 = vshrl.u32 %v501, 7
  %v503 = vsub.s32 3, %v502
  %v504 = vrot.slane %v21, %v503
  %v505 = vmul.f32 %v424, %v504
  %v506 = vmul.f32 %v429, %v504
  %v507 = vmul.f32 %v434, %v504
  %v508 = vmul.f32 %v439, %v504
  %v509 = vmul.f32 %v444, %v504
  %v510 = vmul.f32 %v449, %v504
  %v511 = vmul.f32 %v454, %v504
  %v512 = vmul.f32 %v459, %v504
  %v513 = vmul.f32 %v464, %v504
  %v514 = vmul.f32 %v469, %v504
  %v515 = vmul.f32 %v474, %v504
  %v516 = vmul.f32 %v479, %v504
  %v517 = vmul.f32 %v484, %v504
  %v518 = vmul.f32 %v489, %v504
  %v519 = vmul.f32 %v494, %v504
  %v520 = vmul.f32 %v499, %v504
  %v521 = vadd.f32 %v388, %v505
  %v522 = vadd.f32 %v389, %v506
  %v523 = vadd.f32 %v390, %v507
  %v524 = vadd.f32 %v391, %v508
  %v525 = vadd.f32 %v392, %v509
  %v526 = vadd.f32 %v393, %v510
  %v527 = vadd.f32 %v394, %v511
  %v528 = vadd.f32 %v395, %v512
  %v529 = vadd.f32 %v396, %v513
  %v530 = vadd.f32 %v397, %v514
  %v531 = vadd.f32 %v398, %v515
  %v532 = vadd.f32 %v399, %v516
  %v533 = vadd.f32 %v400, %v517
  %v534 = vadd.f32 %v401, %v518
  %v535 = vadd.f32 %v402, %v519
  %v536 = vadd.f32 %v403, %v520
  %v537 = vld [vmem:[%s2] sm:$0xff]
  %v538 = vld [vmem:[%s2 + $0x8] sm:$0xff]
  %v539 = vld [vmem:[%s2 + $0x10] sm:$0xff]
  %v540 = vld [vmem:[%s2 + $0x18] sm:$0xff]
  %v541 = vld [vmem:[%s2 + $0x20] sm:$0xff]
  %v542 = vld [vmem:[%s2 + $0x28] sm:$0xff]
  %v543 = vld [vmem:[%s2 + $0x30] sm:$0xff]
  %v544 = vld [vmem:[%s2 + $0x38] sm:$0xff]
  %v545 = vld [vmem:[%s2 + $0x40] sm:$0xff]
  %v546 = vld [vmem:[%s2 + $0x48] sm:$0xff]
  %v547 = vld [vmem:[%s2 + $0x50] sm:$0xff]
  %v548 = vld [vmem:[%s2 + $0x58] sm:$0xff]
  %v549 = vld [vmem:[%s2 + $0x60] sm:$0xff]
  %v550 = vld [vmem:[%s2 + $0x68] sm:$0xff]
  %v551 = vld [vmem:[%s2 + $0x70] sm:$0xff]
  %v552 = vld [vmem:[%s2 + $0x78] sm:$0xff]
  %554 = vset.pattern.permute.xlu0 0
  %555 = vperm.xlu0 %554, %v537
  %v556 = vpop.permute.xlu0 %555
  %559 = vset.pattern.permute.xlu0 0
  %560 = vperm.xlu0 %559, %v538
  %v561 = vpop.permute.xlu0 %560
  %564 = vset.pattern.permute.xlu0 0
  %565 = vperm.xlu0 %564, %v539
  %v566 = vpop.permute.xlu0 %565
  %569 = vset.pattern.permute.xlu0 0
  %570 = vperm.xlu0 %569, %v540
  %v571 = vpop.permute.xlu0 %570
  %574 = vset.pattern.permute.xlu0 0
  %575 = vperm.xlu0 %574, %v541
  %v576 = vpop.permute.xlu0 %575
  %579 = vset.pattern.permute.xlu0 0
  %580 = vperm.xlu0 %579, %v542
  %v581 = vpop.permute.xlu0 %580
  %584 = vset.pattern.permute.xlu0 0
  %585 = vperm.xlu0 %584, %v543
  %v586 = vpop.permute.xlu0 %585
  %589 = vset.pattern.permute.xlu0 0
  %590 = vperm.xlu0 %589, %v544
  %v591 = vpop.permute.xlu0 %590
  %594 = vset.pattern.permute.xlu0 0
  %595 = vperm.xlu0 %594, %v545
  %v596 = vpop.permute.xlu0 %595
  %599 = vset.pattern.permute.xlu0 0
  %600 = vperm.xlu0 %599, %v546
  %v601 = vpop.permute.xlu0 %600
  %604 = vset.pattern.permute.xlu0 0
  %605 = vperm.xlu0 %604, %v547
  %v606 = vpop.permute.xlu0 %605
  %609 = vset.pattern.permute.xlu0 0
  %610 = vperm.xlu0 %609, %v548
  %v611 = vpop.permute.xlu0 %610
  %614 = vset.pattern.permute.xlu0 0
  %615 = vperm.xlu0 %614, %v549
  %v616 = vpop.permute.xlu0 %615
  %619 = vset.pattern.permute.xlu0 0
  %620 = vperm.xlu0 %619, %v550
  %v621 = vpop.permute.xlu0 %620
  %624 = vset.pattern.permute.xlu0 0
  %625 = vperm.xlu0 %624, %v551
  %v626 = vpop.permute.xlu0 %625
  %629 = vset.pattern.permute.xlu0 0
  %630 = vperm.xlu0 %629, %v552
  %v631 = vpop.permute.xlu0 %630
  %v633 = vadd.f32 %v521, %v556
  %v634 = vadd.f32 %v522, %v561
  %v635 = vadd.f32 %v523, %v566
  %v636 = vadd.f32 %v524, %v571
  %v637 = vadd.f32 %v525, %v576
  %v638 = vadd.f32 %v526, %v581
  %v639 = vadd.f32 %v527, %v586
  %v640 = vadd.f32 %v528, %v591
  %v641 = vadd.f32 %v529, %v596
  %v642 = vadd.f32 %v530, %v601
  %v643 = vadd.f32 %v531, %v606
  %v644 = vadd.f32 %v532, %v611
  %v645 = vadd.f32 %v533, %v616
  %v646 = vadd.f32 %v534, %v621
  %v647 = vadd.f32 %v535, %v626
  %v648 = vadd.f32 %v536, %v631
  %v649 = vmax.f32 %v633, 0.0
  %v650 = vmax.f32 %v634, 0.0
  %v651 = vmax.f32 %v635, 0.0
  %v652 = vmax.f32 %v636, 0.0
  %v653 = vmax.f32 %v637, 0.0
  %v654 = vmax.f32 %v638, 0.0
  %v655 = vmax.f32 %v639, 0.0
  %v656 = vmax.f32 %v640, 0.0
  %v657 = vmax.f32 %v641, 0.0
  %v658 = vmax.f32 %v642, 0.0
  %v659 = vmax.f32 %v643, 0.0
  %v660 = vmax.f32 %v644, 0.0
  %v661 = vmax.f32 %v645, 0.0
  %v662 = vmax.f32 %v646, 0.0
  %v663 = vmax.f32 %v647, 0.0
  %v664 = vmax.f32 %v648, 0.0
  %v665 = vld [vmem:[%s3] sm:$0xff]
  %v666 = vld [vmem:[%s3 + $0x8] sm:$0xff]
  %v667 = vld [vmem:[%s3 + $0x10] sm:$0xff]
  %v668 = vld [vmem:[%s3 + $0x18] sm:$0xff]
  %v669 = vld [vmem:[%s3 + $0x20] sm:$0xff]
  %v670 = vld [vmem:[%s3 + $0x28] sm:$0xff]
  %v671 = vld [vmem:[%s3 + $0x30] sm:$0xff]
  %v672 = vld [vmem:[%s3 + $0x38] sm:$0xff]
  %v673 = vld [vmem:[%s3 + $0x40] sm:$0xff]
  %v674 = vld [vmem:[%s3 + $0x48] sm:$0xff]
  %v675 = vld [vmem:[%s3 + $0x50] sm:$0xff]
  %v676 = vld [vmem:[%s3 + $0x58] sm:$0xff]
  %v677 = vld [vmem:[%s3 + $0x60] sm:$0xff]
  %v678 = vld [vmem:[%s3 + $0x68] sm:$0xff]
  %v679 = vld [vmem:[%s3 + $0x70] sm:$0xff]
  %v680 = vld [vmem:[%s3 + $0x78] sm:$0xff]
  %682 = vset.pattern.permute.xlu0 0
  %683 = vperm.xlu0 %682, %v665
  %v684 = vpop.permute.xlu0 %683
  %687 = vset.pattern.permute.xlu0 0
  %688 = vperm.xlu0 %687, %v666
  %v689 = vpop.permute.xlu0 %688
  %692 = vset.pattern.permute.xlu0 0
  %693 = vperm.xlu0 %692, %v667
  %v694 = vpop.permute.xlu0 %693
  %697 = vset.pattern.permute.xlu0 0
  %698 = vperm.xlu0 %697, %v668
  %v699 = vpop.permute.xlu0 %698
  %702 = vset.pattern.permute.xlu0 0
  %703 = vperm.xlu0 %702, %v669
  %v704 = vpop.permute.xlu0 %703
  %707 = vset.pattern.permute.xlu0 0
  %708 = vperm.xlu0 %707, %v670
  %v709 = vpop.permute.xlu0 %708
  %712 = vset.pattern.permute.xlu0 0
  %713 = vperm.xlu0 %712, %v671
  %v714 = vpop.permute.xlu0 %713
  %717 = vset.pattern.permute.xlu0 0
  %718 = vperm.xlu0 %717, %v672
  %v719 = vpop.permute.xlu0 %718
  %722 = vset.pattern.permute.xlu0 0
  %723 = vperm.xlu0 %722, %v673
  %v724 = vpop.permute.xlu0 %723
  %727 = vset.pattern.permute.xlu0 0
  %728 = vperm.xlu0 %727, %v674
  %v729 = vpop.permute.xlu0 %728
  %732 = vset.pattern.permute.xlu0 0
  %733 = vperm.xlu0 %732, %v675
  %v734 = vpop.permute.xlu0 %733
  %737 = vset.pattern.permute.xlu0 0
  %738 = vperm.xlu0 %737, %v676
  %v739 = vpop.permute.xlu0 %738
  %742 = vset.pattern.permute.xlu0 0
  %743 = vperm.xlu0 %742, %v677
  %v744 = vpop.permute.xlu0 %743
  %747 = vset.pattern.permute.xlu0 0
  %748 = vperm.xlu0 %747, %v678
  %v749 = vpop.permute.xlu0 %748
  %752 = vset.pattern.permute.xlu0 0
  %753 = vperm.xlu0 %752, %v679
  %v754 = vpop.permute.xlu0 %753
  %757 = vset.pattern.permute.xlu0 0
  %758 = vperm.xlu0 %757, %v680
  %v759 = vpop.permute.xlu0 %758
  %v761 = vmul.f32 %v649, %v684
  %v762 = vmul.f32 %v650, %v689
  %v763 = vmul.f32 %v651, %v694
  %v764 = vmul.f32 %v652, %v699
  %v765 = vmul.f32 %v653, %v704
  %v766 = vmul.f32 %v654, %v709
  %v767 = vmul.f32 %v655, %v714
  %v768 = vmul.f32 %v656, %v719
  %v769 = vmul.f32 %v657, %v724
  %v770 = vmul.f32 %v658, %v729
  %v771 = vmul.f32 %v659, %v734
  %v772 = vmul.f32 %v660, %v739
  %v773 = vmul.f32 %v661, %v744
  %v774 = vmul.f32 %v662, %v749
  %v775 = vmul.f32 %v663, %v754
  %v776 = vmul.f32 %v664, %v759
  %v777 = vadd.f32 %v761, %v762
  %v778 = vadd.f32 %v777, %v763
  %v779 = vadd.f32 %v778, %v764
  %v780 = vadd.f32 %v779, %v765
  %v781 = vadd.f32 %v780, %v766
  %v782 = vadd.f32 %v781, %v767
  %v783 = vadd.f32 %v782, %v768
  %v784 = vadd.f32 %v783, %v769
  %v785 = vadd.f32 %v784, %v770
  %v786 = vadd.f32 %v785, %v771
  %v787 = vadd.f32 %v786, %v772
  %v788 = vadd.f32 %v787, %v773
  %v789 = vadd.f32 %v788, %v774
  %v790 = vadd.f32 %v789, %v775
  %v791 = vadd.f32 %v790, %v776
  %v792 = vrot.slane %v791, 4
  %v793 = vadd.f32 %v791, %v792
  %v794 = vrot.slane %v793, 2
  %v795 = vadd.f32 %v793, %v794
  %v796 = vrot.slane %v795, 1
  %v797 = vadd.f32 %v795, %v796
  %s798 = sld [smem:[#allocation2]]
  %v799 = vstv %s798
  %v800 = vadd.f32 %v797, %v799
  %801 = vst [vmem:[%s5] sm:$0x1] %v800
  // Predicated region
  $region22: #{critic_forward.1} parent=0 // pred_check
    _
  $region23: #{critic_forward.1} parent=0 // pred_check_branch
    %803 = sbr.rel (0) target = $region25
  $region24: #{critic_forward.1} parent=0 // pred_region
    _
  $region25: #{critic_forward.1} parent=0 // pred_fallthru
    _
  // Predicated region
  $region26: #{critic_forward.1} parent=0 // pred_check
    _
  $region27: #{critic_forward.1} parent=0 // pred_check_branch
    %805 = sbr.rel (0) target = $region29
  $region28: #{critic_forward.1} parent=0 // pred_region
    _
  $region29: #{critic_forward.1} parent=0 // pred_fallthru
    _

</llo_original>
